<compile_context>
chip_gen: v7x
topology: tpu7x:2x2x1
jax: 0.10.0
libtpu: 0.0.40
codegen_flags: <defaults>
</compile_context>

<pallas_src>
import functools

import jax
import jax.numpy as jnp
from jax.experimental import pallas as pl
from jax.experimental.pallas import tpu as pltpu


def se_block_kernel(x_ref, w1t_ref, b1_ref, w2t_ref, b2_ref, alpha_ref, o_ref,
                    *, inv_hw):
    # x block: (Nb, C, HWp), lane-dense along the (padded) spatial axis.
    x = x_ref[...]
    xf = x.astype(jnp.float32)

    # Global average pool over spatial lanes. Zero-padded lanes (if any) do not
    # change the sum; divide by the true spatial size baked in at trace time.
    pooled = jnp.sum(xf, axis=2) * inv_hw                      # (Nb, C) rows

    # SE MLP in row form (weights pre-transposed in the wrapper, contraction on
    # the lane axis of the LHS), batched over all Nb samples in the block.
    z = jnp.dot(pooled, w1t_ref[...],
                preferred_element_type=jnp.float32) + b1_ref[...]   # (Nb, Cr)
    alpha = alpha_ref[0, 0]                                     # SMEM scalar
    z = jnp.where(z >= 0, z, alpha * z)                         # PReLU (shared alpha)
    g = jnp.dot(z, w2t_ref[...],
                preferred_element_type=jnp.float32) + b2_ref[...]   # (Nb, C)
    s = jax.nn.sigmoid(g)                                       # EUP exp path

    # Channel-wise re-weighting: (Nb, C, HWp) * (Nb, C, 1) broadcasts over lanes.
    o_ref[...] = (xf * s[:, :, None]).astype(o_ref.dtype)


def se_block_forward(x_nchw, params, *, target_block_bytes=2 << 20):
    """x_nchw: [N, C, H, W] (PyTorch layout). Returns [N, C, H, W]."""
    N, C, H, W = x_nchw.shape
    HW = H * W
    Cr = params["fc1_w"].shape[0]
    dtype = x_nchw.dtype
    itemsize = jnp.dtype(dtype).itemsize

    # Lane-dense layout; pad the spatial axis up to a multiple of 128 so the
    # writeback is unmasked full-width vst (H=W=16 -> 256 already aligned).
    HWp = max(128, ((HW + 127) // 128) * 128)
    x = x_nchw.reshape(N, C, HW)
    if HWp != HW:
        x = jnp.pad(x, ((0, 0), (0, 0), (0, HWp - HW)))

    # Samples per block: aim for ~target_block_bytes per x block (keeps the
    # 2-in + 2-out double buffers inside every generation's scoped VMEM default
    # without needing vmem_limit_bytes), but keep >= 2 grid steps when N >= 2
    # so v7x's two TensorCores both get parallel work.
    per_sample = C * HWp * itemsize
    nb = max(1, target_block_bytes // per_sample)
    if N >= 2:
        nb = min(nb, N // 2)
    nb = int(max(1, min(nb, N)))

    n_pad = (-N) % nb
    if n_pad:  # pad on the sample axis only; padded samples are sliced off.
        x = jnp.pad(x, ((0, n_pad), (0, 0), (0, 0)))
    Np = N + n_pad
    grid = (Np // nb,)

    # Pre-transpose weights once so both MLP dots contract on the lane axis.
    w1t = params["fc1_w"].T.astype(jnp.float32)                 # (C, Cr)
    w2t = params["fc2_w"].T.astype(jnp.float32)                 # (Cr, C)
    b1 = params["fc1_b"].reshape(1, Cr).astype(jnp.float32)     # (1, Cr)
    b2 = params["fc2_b"].reshape(1, C).astype(jnp.float32)      # (1, C)
    alpha = params["alpha"].reshape(1, 1).astype(jnp.float32)   # SMEM scalar

    kernel = functools.partial(se_block_kernel, inv_hw=1.0 / HW)

    out = pl.pallas_call(
        kernel,
        out_shape=jax.ShapeDtypeStruct((Np, C, HWp), dtype),
        grid_spec=pltpu.PrefetchScalarGridSpec(
            num_scalar_prefetch=0,
            grid=grid,
            in_specs=[
                pl.BlockSpec((nb, C, HWp), lambda n: (n, 0, 0)),   # x (Nb samples)
                pl.BlockSpec((C, Cr), lambda n: (0, 0)),           # fc1 weight^T
                pl.BlockSpec((1, Cr), lambda n: (0, 0)),           # fc1 bias row
                pl.BlockSpec((Cr, C), lambda n: (0, 0)),           # fc2 weight^T
                pl.BlockSpec((1, C), lambda n: (0, 0)),            # fc2 bias row
                pl.BlockSpec(memory_space=pltpu.MemorySpace.SMEM), # PReLU alpha
            ],
            out_specs=pl.BlockSpec((nb, C, HWp), lambda n: (n, 0, 0)),
        ),
        compiler_params=pltpu.CompilerParams(
            dimension_semantics=("parallel",)),
    )(x, w1t, b1, w2t, b2, alpha)

    out = out[:N, :, :HW]
    return out.reshape(N, C, H, W)


if __name__ == "__main__":
    key = jax.random.PRNGKey(0)
    # channel must be >= reduction (=16) for Linear(channel, channel//16);
    # use channel=32 -> hidden dim Cr=2.
    N, C, H, W = 2, 32, 16, 16
    R = 16
    Cr = C // R

    keys = jax.random.split(key, 5)
    x = jax.random.normal(keys[0], (N, C, H, W), jnp.float32)

    params = dict(
        fc1_w=0.2 * jax.random.normal(keys[1], (Cr, C), jnp.float32),  # [out, in]
        fc1_b=0.1 * jax.random.normal(keys[2], (Cr,), jnp.float32),
        alpha=jnp.full((1,), 0.25, jnp.float32),                       # nn.PReLU() default
        fc2_w=0.2 * jax.random.normal(keys[3], (C, Cr), jnp.float32),  # [out, in]
        fc2_b=0.1 * jax.random.normal(keys[4], (C,), jnp.float32),
    )

    out = se_block_forward(x, params)
    jax.block_until_ready(out)
    assert out.shape == (N, C, H, W)

    # Pure-JAX reference check (same math as the PyTorch module).
    y = jnp.mean(x, axis=(2, 3))                                   # (N, C)
    z = y @ params["fc1_w"].T + params["fc1_b"]
    z = jnp.where(z >= 0, z, params["alpha"][0] * z)
    z = z @ params["fc2_w"].T + params["fc2_b"]
    s = jax.nn.sigmoid(z)
    ref = x * s[:, :, None, None]
    assert jnp.allclose(out, ref, atol=1e-4, rtol=1e-4)

    print("KERNEL_OK")
</pallas_src>

<mosaic_0001>
module attributes {stable_mosaic.version = 11 : i64} {
  func.func @se_block_kernel(%arg0: i32, %arg1: memref<1x32x256xf32, #tpu.memory_space<vmem>>, %arg2: memref<32x2xf32, #tpu.memory_space<vmem>>, %arg3: memref<1x2xf32, #tpu.memory_space<vmem>>, %arg4: memref<2x32xf32, #tpu.memory_space<vmem>>, %arg5: memref<1x32xf32, #tpu.memory_space<vmem>>, %arg6: memref<1x1xf32, #tpu.memory_space<smem>>, %arg7: memref<1x32x256xf32, #tpu.memory_space<vmem>>) attributes {dimension_semantics = [#tpu.dimension_semantics<parallel>], iteration_bounds = array<i64: 2>, scalar_prefetch = 0 : i64, scratch_operands = 0 : i64, tpu.core_type = #tpu.core_type<tc>, window_params = [{transform_indices = @transform_0, window_bounds = array<i64: 1, 32, 256>}, {pipeline_mode = #tpu.pipeline_mode<synchronous>, transform_indices = @transform_1, window_bounds = array<i64: 32, 2>}, {pipeline_mode = #tpu.pipeline_mode<synchronous>, transform_indices = @transform_2, window_bounds = array<i64: 1, 2>}, {pipeline_mode = #tpu.pipeline_mode<synchronous>, transform_indices = @transform_3, window_bounds = array<i64: 2, 32>}, {pipeline_mode = #tpu.pipeline_mode<synchronous>, transform_indices = @transform_4, window_bounds = array<i64: 1, 32>}, {transform_indices = @transform_5, window_bounds = array<i64: 1, 1>}, {transform_indices = @transform_6, window_bounds = array<i64: 1, 32, 256>}]} {
    %c0 = arith.constant 0 : index
    %c0_0 = arith.constant 0 : index
    %c0_1 = arith.constant 0 : index
    %0 = vector.load %arg1[%c0, %c0_0, %c0_1] : memref<1x32x256xf32, #tpu.memory_space<vmem>>, vector<1x32x256xf32>
    %cst = arith.constant dense<0.000000e+00> : vector<1x32xf32>
    %1 = vector.multi_reduction <add>, %0, %cst [2] : vector<1x32x256xf32> to vector<1x32xf32>
    %cst_2 = arith.constant 3.906250e-03 : f32
    %2 = vector.broadcast %cst_2 : f32 to vector<1x32xf32>
    %3 = arith.mulf %1, %2 : vector<1x32xf32>
    %c0_3 = arith.constant 0 : index
    %c0_4 = arith.constant 0 : index
    %4 = vector.load %arg2[%c0_3, %c0_4] : memref<32x2xf32, #tpu.memory_space<vmem>>, vector<32x2xf32>
    %cst_5 = arith.constant dense<0.000000e+00> : vector<1x2xf32>
    %5 = tpu.matmul %3, %4, %cst_5 {dimension_numbers = #tpu.dot_dimension_numbers<[1], [0], [0], [1], [0, 0, 1, 1], [], []>} : vector<1x32xf32>, vector<32x2xf32>, vector<1x2xf32> -> vector<1x2xf32>
    %c0_6 = arith.constant 0 : index
    %c0_7 = arith.constant 0 : index
    %6 = vector.load %arg3[%c0_6, %c0_7] : memref<1x2xf32, #tpu.memory_space<vmem>>, vector<1x2xf32>
    %7 = arith.addf %5, %6 : vector<1x2xf32>
    %c0_8 = arith.constant 0 : index
    %c0_9 = arith.constant 0 : index
    %8 = memref.load %arg6[%c0_8, %c0_9] : memref<1x1xf32, #tpu.memory_space<smem>>
    %cst_10 = arith.constant 0.000000e+00 : f32
    %9 = vector.broadcast %cst_10 : f32 to vector<1x2xf32>
    %10 = arith.cmpf oge, %7, %9 : vector<1x2xf32>
    %11 = vector.broadcast %8 : f32 to vector<1x2xf32>
    %12 = arith.mulf %11, %7 : vector<1x2xf32>
    %13 = arith.select %10, %7, %12 : vector<1x2xi1>, vector<1x2xf32>
    %c0_11 = arith.constant 0 : index
    %c0_12 = arith.constant 0 : index
    %14 = vector.load %arg4[%c0_11, %c0_12] : memref<2x32xf32, #tpu.memory_space<vmem>>, vector<2x32xf32>
    %cst_13 = arith.constant dense<0.000000e+00> : vector<1x32xf32>
    %15 = tpu.matmul %13, %14, %cst_13 {dimension_numbers = #tpu.dot_dimension_numbers<[1], [0], [0], [1], [0, 0, 1, 1], [], []>} : vector<1x2xf32>, vector<2x32xf32>, vector<1x32xf32> -> vector<1x32xf32>
    %c0_14 = arith.constant 0 : index
    %c0_15 = arith.constant 0 : index
    %16 = vector.load %arg5[%c0_14, %c0_15] : memref<1x32xf32, #tpu.memory_space<vmem>>, vector<1x32xf32>
    %17 = arith.addf %15, %16 : vector<1x32xf32>
    %18 = arith.negf %17 : vector<1x32xf32>
    %19 = math.exp %18 : vector<1x32xf32>
    %cst_16 = arith.constant 1.000000e+00 : f32
    %20 = vector.broadcast %cst_16 : f32 to vector<1x32xf32>
    %21 = arith.addf %20, %19 : vector<1x32xf32>
    %22 = arith.divf %20, %21 : vector<1x32xf32>
    %23 = vector.shape_cast %22 : vector<1x32xf32> to vector<1x32x1xf32>
    %24 = vector.broadcast %23 : vector<1x32x1xf32> to vector<1x32x256xf32>
    %25 = arith.mulf %0, %24 : vector<1x32x256xf32>
    %c0_17 = arith.constant 0 : index
    %c0_18 = arith.constant 0 : index
    %c0_19 = arith.constant 0 : index
    %26 = vector.load %arg7[%c0_17, %c0_18, %c0_19] : memref<1x32x256xf32, #tpu.memory_space<vmem>>, vector<1x32x256xf32>
    tpu.vector_store %arg7[%c0_17, %c0_18, %c0_19], %25 {strides = array<i32>} : memref<1x32x256xf32, #tpu.memory_space<vmem>>, vector<1x32x256xf32>,
    return
  }
  func.func @transform_0(%arg0: i32) -> (i32, i32, i32) {
    %c0_i32 = arith.constant 0 : i32
    %c0_i32_0 = arith.constant 0 : i32
    %c0_i32_1 = arith.constant 0 : i32
    return %arg0, %c0_i32, %c0_i32_0 : i32, i32, i32
  }
  func.func @transform_1(%arg0: i32) -> (i32, i32) {
    %c0_i32 = arith.constant 0 : i32
    %c0_i32_0 = arith.constant 0 : i32
    %c0_i32_1 = arith.constant 0 : i32
    return %c0_i32, %c0_i32_0 : i32, i32
  }
  func.func @transform_2(%arg0: i32) -> (i32, i32) {
    %c0_i32 = arith.constant 0 : i32
    %c0_i32_0 = arith.constant 0 : i32
    %c0_i32_1 = arith.constant 0 : i32
    return %c0_i32, %c0_i32_0 : i32, i32
  }
  func.func @transform_3(%arg0: i32) -> (i32, i32) {
    %c0_i32 = arith.constant 0 : i32
    %c0_i32_0 = arith.constant 0 : i32
    %c0_i32_1 = arith.constant 0 : i32
    return %c0_i32, %c0_i32_0 : i32, i32
  }
  func.func @transform_4(%arg0: i32) -> (i32, i32) {
    %c0_i32 = arith.constant 0 : i32
    %c0_i32_0 = arith.constant 0 : i32
    %c0_i32_1 = arith.constant 0 : i32
    return %c0_i32, %c0_i32_0 : i32, i32
  }
  func.func @transform_5(%arg0: i32) -> (i32, i32) {
    %c0_i32 = arith.constant 0 : i32
    %c0_i32_0 = arith.constant 0 : i32
    %c0_i32_1 = arith.constant 0 : i32
    return %c0_i32, %c0_i32_0 : i32, i32
  }
  func.func @transform_6(%arg0: i32) -> (i32, i32, i32) {
    %c0_i32 = arith.constant 0 : i32
    %c0_i32_0 = arith.constant 0 : i32
    %c0_i32_1 = arith.constant 0 : i32
    return %arg0, %c0_i32, %c0_i32_0 : i32, i32, i32
  }
}

</mosaic_0001>

<llo_original>
// kernel: tpu_custom_call.1
$region0: #{tpu_custom_call.1}
  #allocation0 [shape = 'u32[]', space=smem, size = 0x4, offset = 0x4, fixed_abs, tag = 'smem constant byte address 0x4 - core index']
  #allocation1 [shape = 'u32[144,128]{1,0:T(1,128)}', space=vmem, size = 0x12000, scoped, tag = 'internal scratch']
  #allocation2 [shape = 'f32[1,1]{1,0:T(1,128)S(6)}', space=smem, size = 0x200, scoped, tag = 'scoped memory for tpu_custom_call.1']
  %s0 = inlined_call_operand.hbm [shape: f32[2,32,256], index: 0, kind: input, shape index: {}]
  %s1 = inlined_call_operand.vmem [shape: f32[32,2], index: 1, kind: input, shape index: {}]
  %s2 = inlined_call_operand.vmem [shape: f32[1,2], index: 2, kind: input, shape index: {}]
  %s3 = inlined_call_operand.vmem [shape: f32[2,32], index: 3, kind: input, shape index: {}]
  %s4 = inlined_call_operand.vmem [shape: f32[1,32], index: 4, kind: input, shape index: {}]
  %s5 = inlined_call_operand.<no memory space> [shape: f32[1,1], index: 5, kind: input, shape index: {}]
  %s6 = inlined_call_operand.hbm [shape: f32[2,32,256], index: 6, kind: output, shape index: {}]
  %s7 = sld [smem:[#allocation0]]
  $region61: #{tpu_custom_call.1} parent=0
    _
  %s9 = ssub.s32 1, %s7
  %s10 = scalar_select 0, %s9, %s7
  %11 = sst [smem:[#allocation2]] %s5
  $region1: #{tpu_custom_call.1} parent=0
    #allocation3 [shape = 'u8[65536]{0}', space=vmem, size = 0x10000, scoped, tag = 'input window, operand 0']
    #allocation4 [shape = 's32[2]{0}', space=sflag, size = 0x8, scoped, tag = 'scoped memory for tpu_custom_call.1']
    #allocation5 [shape = 's32[2]{0}', space=sflag, size = 0x8, scoped, tag = 'scoped memory for tpu_custom_call.1']
    #allocation6 [shape = 'u8[65536]{0}', space=vmem, size = 0x10000, scoped, tag = 'output window, operand 0']
    %12 = vsyncpa [#allocation4], 0
    %s13 = scalar_lea.sflag [#allocation4], 1
    %14 = vsyncpa %s13, 0
    %15 = vsyncpa [#allocation5], 0
    %s16 = scalar_lea.sflag [#allocation5], 1
    %17 = vsyncpa %s16, 0
    loop: start=0, step=1, limit=4
    $region2: #{tpu_custom_call.1} parent=1 // loop_pre_header
      _
    $region3: #{tpu_custom_call.1} parent=1 // loop_header
      %s19 = sphi 0, %s23
      %p20 = scmp.ge.s32.totalorder %s19, 4
      %s29 = sphi 0, %s31
      %s32 = sphi 0, %s29
      %s33 = sphi 0, %s32
      %s49 = sphi 0, %s33
      %s53 = sphi 0, %s53
      %s55 = sphi 0, %s53
      %s56 = sphi 0, %s55
      %s70 = sphi 0, %s56
      %s74 = sphi 0, %s74
      %s76 = sphi 0, %s74
      %s77 = sphi 0, %s76
      %s91 = sphi 0, %s77
      %s95 = sphi 0, %s95
      %s97 = sphi 0, %s95
      %s98 = sphi 0, %s97
      %s112 = sphi 0, %s98
      %s116 = sphi 0, %s116
      %s118 = sphi 0, %s116
      %s119 = sphi 0, %s118
      %s133 = sphi 0, %s119
      %s137 = sphi 0, %s137
      %s139 = sphi 0, %s137
      %s140 = sphi 0, %s139
      %s154 = sphi 0, %s140
      %s160 = sphi 0, %s162
      %s163 = sphi 0, %s160
      %s164 = sphi 0, %s163
      %s180 = sphi 0, %s164
    $region4: #{tpu_custom_call.1} parent=1 // loop_header_branch
      %22 = sbr.rel (%p20) target = $region8
    $region5: #{tpu_custom_call.1} parent=1 // loop_body
      %s24 = ssub.s32 %s19, 1
      %s25 = ssub.s32 %s19, 2
      %s26 = sadd.s32 %s19, 1
      %s27 = ssub.s32 %s19, %s26
      %p28 = scmp.eq.s32.totalorder %s27, 0
      %s30 = sadd.s32 %s29, 1
      %s31 = scalar_select %p28, %s29, %s30
      %p34 = pneg %p28
      %p35 = scmp.eq.s32.totalorder %s19, 1
      %p36 = por %p34, %p35
      %p37 = scmp.ne.s32.totalorder %s29, %s32
      %p38 = scmp.eq.s32.totalorder %s19, 0
      %p39 = por %p37, %p38
      %p40 = scmp.ne.s32.totalorder %s29, %s32
      %p41 = scmp.eq.s32.totalorder %s24, 1
      %p42 = por %p40, %p41
      %p43 = scmp.ne.s32.totalorder %s32, %s33
      %p44 = scmp.eq.s32.totalorder %s24, 0
      %p45 = por %p43, %p44
      %p46 = scmp.ne.s32.totalorder %s32, %s33
      %p47 = scmp.eq.s32.totalorder %s25, 1
      %p48 = por %p46, %p47
      %p50 = scmp.ne.s32.totalorder %s33, %s49
      %p51 = scmp.eq.s32.totalorder %s25, 0
      %p52 = por %p50, %p51
      %s54 = sadd.s32 %s53, 1
      %p57 = scmp.eq.s32.totalorder %s19, 1
      %p58 = scmp.ne.s32.totalorder %s53, %s55
      %p59 = scmp.eq.s32.totalorder %s19, 0
      %p60 = por %p58, %p59
      %p61 = scmp.ne.s32.totalorder %s53, %s55
      %p62 = scmp.eq.s32.totalorder %s24, 1
      %p63 = por %p61, %p62
      %p64 = scmp.ne.s32.totalorder %s55, %s56
      %p65 = scmp.eq.s32.totalorder %s24, 0
      %p66 = por %p64, %p65
      %p67 = scmp.ne.s32.totalorder %s55, %s56
      %p68 = scmp.eq.s32.totalorder %s25, 1
      %p69 = por %p67, %p68
      %p71 = scmp.ne.s32.totalorder %s56, %s70
      %p72 = scmp.eq.s32.totalorder %s25, 0
      %p73 = por %p71, %p72
      %s75 = sadd.s32 %s74, 1
      %p78 = scmp.eq.s32.totalorder %s19, 1
      %p79 = scmp.ne.s32.totalorder %s74, %s76
      %p80 = scmp.eq.s32.totalorder %s19, 0
      %p81 = por %p79, %p80
      %p82 = scmp.ne.s32.totalorder %s74, %s76
      %p83 = scmp.eq.s32.totalorder %s24, 1
      %p84 = por %p82, %p83
      %p85 = scmp.ne.s32.totalorder %s76, %s77
      %p86 = scmp.eq.s32.totalorder %s24, 0
      %p87 = por %p85, %p86
      %p88 = scmp.ne.s32.totalorder %s76, %s77
      %p89 = scmp.eq.s32.totalorder %s25, 1
      %p90 = por %p88, %p89
      %p92 = scmp.ne.s32.totalorder %s77, %s91
      %p93 = scmp.eq.s32.totalorder %s25, 0
      %p94 = por %p92, %p93
      %s96 = sadd.s32 %s95, 1
      %p99 = scmp.eq.s32.totalorder %s19, 1
      %p100 = scmp.ne.s32.totalorder %s95, %s97
      %p101 = scmp.eq.s32.totalorder %s19, 0
      %p102 = por %p100, %p101
      %p103 = scmp.ne.s32.totalorder %s95, %s97
      %p104 = scmp.eq.s32.totalorder %s24, 1
      %p105 = por %p103, %p104
      %p106 = scmp.ne.s32.totalorder %s97, %s98
      %p107 = scmp.eq.s32.totalorder %s24, 0
      %p108 = por %p106, %p107
      %p109 = scmp.ne.s32.totalorder %s97, %s98
      %p110 = scmp.eq.s32.totalorder %s25, 1
      %p111 = por %p109, %p110
      %p113 = scmp.ne.s32.totalorder %s98, %s112
      %p114 = scmp.eq.s32.totalorder %s25, 0
      %p115 = por %p113, %p114
      %s117 = sadd.s32 %s116, 1
      %p120 = scmp.eq.s32.totalorder %s19, 1
      %p121 = scmp.ne.s32.totalorder %s116, %s118
      %p122 = scmp.eq.s32.totalorder %s19, 0
      %p123 = por %p121, %p122
      %p124 = scmp.ne.s32.totalorder %s116, %s118
      %p125 = scmp.eq.s32.totalorder %s24, 1
      %p126 = por %p124, %p125
      %p127 = scmp.ne.s32.totalorder %s118, %s119
      %p128 = scmp.eq.s32.totalorder %s24, 0
      %p129 = por %p127, %p128
      %p130 = scmp.ne.s32.totalorder %s118, %s119
      %p131 = scmp.eq.s32.totalorder %s25, 1
      %p132 = por %p130, %p131
      %p134 = scmp.ne.s32.totalorder %s119, %s133
      %p135 = scmp.eq.s32.totalorder %s25, 0
      %p136 = por %p134, %p135
      %s138 = sadd.s32 %s137, 1
      %p141 = scmp.eq.s32.totalorder %s19, 1
      %p142 = scmp.ne.s32.totalorder %s137, %s139
      %p143 = scmp.eq.s32.totalorder %s19, 0
      %p144 = por %p142, %p143
      %p145 = scmp.ne.s32.totalorder %s137, %s139
      %p146 = scmp.eq.s32.totalorder %s24, 1
      %p147 = por %p145, %p146
      %p148 = scmp.ne.s32.totalorder %s139, %s140
      %p149 = scmp.eq.s32.totalorder %s24, 0
      %p150 = por %p148, %p149
      %p151 = scmp.ne.s32.totalorder %s139, %s140
      %p152 = scmp.eq.s32.totalorder %s25, 1
      %p153 = por %p151, %p152
      %p155 = scmp.ne.s32.totalorder %s140, %s154
      %p156 = scmp.eq.s32.totalorder %s25, 0
      %p157 = por %p155, %p156
      %s158 = ssub.s32 %s19, %s26
      %p159 = scmp.eq.s32.totalorder %s158, 0
      %s161 = sadd.s32 %s160, 1
      %s162 = scalar_select %p159, %s160, %s161
      %p165 = pneg %p159
      %p166 = scmp.eq.s32.totalorder %s19, 1
      %p167 = por %p165, %p166
      %p168 = scmp.ne.s32.totalorder %s160, %s163
      %p169 = scmp.eq.s32.totalorder %s19, 0
      %p170 = por %p168, %p169
      %p171 = scmp.ne.s32.totalorder %s160, %s163
      %p172 = scmp.eq.s32.totalorder %s24, 1
      %p173 = por %p171, %p172
      %p174 = scmp.ne.s32.totalorder %s163, %s164
      %p175 = scmp.eq.s32.totalorder %s24, 0
      %p176 = por %p174, %p175
      %p177 = scmp.ne.s32.totalorder %s163, %s164
      %p178 = scmp.eq.s32.totalorder %s25, 1
      %p179 = por %p177, %p178
      %p181 = scmp.ne.s32.totalorder %s164, %s180
      %p182 = scmp.eq.s32.totalorder %s25, 0
      %p183 = por %p181, %p182
      %p184 = scmp.le.s32.totalorder 1, %s19
      %p185 = scmp.lt.s32.totalorder %s19, 3
      %p186 = pnand %p184, %p185
      %p187 = pneg %p186
      // Predicated region
      $region9: #{tpu_custom_call.1} parent=5 // pred_check
        _
      $region10: #{tpu_custom_call.1} parent=5 // pred_check_branch
        %189 = sbr.rel (%p186) target = $region12
      $region11: #{tpu_custom_call.1} parent=5 // pred_region
        %s190 = ssub.s32 %s19, 1
        // Predicated region
        $region13: #{tpu_custom_call.1} parent=11 // pred_check
          %p191 = pneg %p66
        $region14: #{tpu_custom_call.1} parent=11 // pred_check_branch
          %193 = sbr.rel (%p191) target = $region16
        $region15: #{tpu_custom_call.1} parent=11 // pred_region
          _
        $region16: #{tpu_custom_call.1} parent=11 // pred_fallthru
          _
        // Predicated region
        $region17: #{tpu_custom_call.1} parent=11 // pred_check
          %p194 = pneg %p87
        $region18: #{tpu_custom_call.1} parent=11 // pred_check_branch
          %196 = sbr.rel (%p194) target = $region20
        $region19: #{tpu_custom_call.1} parent=11 // pred_region
          _
        $region20: #{tpu_custom_call.1} parent=11 // pred_fallthru
          _
        // Predicated region
        $region21: #{tpu_custom_call.1} parent=11 // pred_check
          %p197 = pneg %p108
        $region22: #{tpu_custom_call.1} parent=11 // pred_check_branch
          %199 = sbr.rel (%p197) target = $region24
        $region23: #{tpu_custom_call.1} parent=11 // pred_region
          _
        $region24: #{tpu_custom_call.1} parent=11 // pred_fallthru
          _
        // Predicated region
        $region25: #{tpu_custom_call.1} parent=11 // pred_check
          %p200 = pneg %p129
        $region26: #{tpu_custom_call.1} parent=11 // pred_check_branch
          %202 = sbr.rel (%p200) target = $region28
        $region27: #{tpu_custom_call.1} parent=11 // pred_region
          _
        $region28: #{tpu_custom_call.1} parent=11 // pred_fallthru
          _
        // Predicated region
        $region29: #{tpu_custom_call.1} parent=11 // pred_check
          %p203 = pneg %p150
        $region30: #{tpu_custom_call.1} parent=11 // pred_check_branch
          %205 = sbr.rel (%p203) target = $region32
        $region31: #{tpu_custom_call.1} parent=11 // pred_region
          _
        $region32: #{tpu_custom_call.1} parent=11 // pred_fallthru
          _
      $region12: #{tpu_custom_call.1} parent=5 // pred_fallthru
        _
      %p206 = scmp.lt.s32.totalorder %s19, 2
      // Predicated region
      $region33: #{tpu_custom_call.1} parent=5 // pred_check
        %p207 = pneg %p206
      $region34: #{tpu_custom_call.1} parent=5 // pred_check_branch
        %209 = sbr.rel (%p207) target = $region36
      $region35: #{tpu_custom_call.1} parent=5 // pred_region
        // Predicated region
        $region37: #{tpu_custom_call.1} parent=35 // pred_check
          %p210 = pneg %p39
        $region38: #{tpu_custom_call.1} parent=35 // pred_check_branch
          %212 = sbr.rel (%p210) target = $region40
        $region39: #{tpu_custom_call.1} parent=35 // pred_region
          %s213 = sand.u32 %s29, 1
          %s214 = scalar_lea.sflag [#allocation4], %s213
          %s215 = sand.u32 %s29, 1
          %s216 = smul.addr %s215, 64
          %s217 = scalar_lea.vmem [#allocation3], %s216
          %s219 = ssub.s32 1024, 1024
          %220 = vsyncadd %s214, %s219
          %s221 = smul.addr %s19, 8
          %s222 = smul.addr %s221, 128
          %s223 = scalar_lea.hbm %s0, %s222
          %s224 = sshll.u32 %s217, 4
          %s225 = int_to_ptr.vmem [resolvable:$true] %s224
          %230 = dma.hbm_to_vmem [thread:$0]  %s223, 1024, %s225, %s214, 256, 256, 16
        $region40: #{tpu_custom_call.1} parent=35 // pred_fallthru
          _
      $region36: #{tpu_custom_call.1} parent=5 // pred_fallthru
        _
      %p231 = scmp.le.s32.totalorder 1, %s19
      %p232 = scmp.lt.s32.totalorder %s19, 3
      %p233 = pnand %p231, %p232
      %p234 = pneg %p233
      // Predicated region
      $region41: #{tpu_custom_call.1} parent=5 // pred_check
        _
      $region42: #{tpu_custom_call.1} parent=5 // pred_check_branch
        %236 = sbr.rel (%p233) target = $region44
      $region43: #{tpu_custom_call.1} parent=5 // pred_region
        %s237 = ssub.s32 %s19, 1
        %s238 = sand.u32 %s32, 1
        %s239 = scalar_lea.sflag [#allocation4], %s238
        %s240 = sand.u32 %s32, 1
        %s241 = smul.addr %s240, 64
        %s242 = scalar_lea.vmem [#allocation3], %s241
        // Predicated region
        $region45: #{tpu_custom_call.1} parent=43 // pred_check
          %p243 = pneg %p45
        $region46: #{tpu_custom_call.1} parent=43 // pred_check_branch
          %245 = sbr.rel (%p243) target = $region48
        $region47: #{tpu_custom_call.1} parent=43 // pred_region
          %246 = dma.done %s239, 1024
        $region48: #{tpu_custom_call.1} parent=43 // pred_fallthru
          _
        %s247 = sand.u32 %s32, 1
        %s248 = scalar_lea.sflag [#allocation4], %s247
        %s249 = sand.u32 %s32, 1
        %s250 = smul.addr %s249, 64
        %s251 = scalar_lea.vmem [#allocation3], %s250
        %p252 = pneg %p45
        %p253 = pneg %p42
        %p254 = pneg %p66
        %p255 = pneg %p63
        %p256 = pneg %p87
        %p257 = pneg %p84
        %p258 = pneg %p108
        %p259 = pneg %p105
        %p260 = pneg %p129
        %p261 = pneg %p126
        %p262 = pneg %p150
        %p263 = pneg %p147
        %p264 = pneg %p176
        %p265 = pneg %p173
        %s266 = sand.u32 %s163, 1
        %s267 = scalar_lea.sflag [#allocation5], %s266
        %s268 = sand.u32 %s163, 1
        %s269 = smul.addr %s268, 64
        %s270 = scalar_lea.vmem [#allocation6], %s269
        %v271 = vld [vmem:[%s242] sm:$0xff]
        %v272 = vld [vmem:[%s242 + $0x8] sm:$0xff]
        %v273 = vld [vmem:[%s242 + $0x10] sm:$0xff]
        %v274 = vld [vmem:[%s242 + $0x18] sm:$0xff]
        %v275 = vld [vmem:[%s242 + $0x20] sm:$0xff]
        %v276 = vld [vmem:[%s242 + $0x28] sm:$0xff]
        %v277 = vld [vmem:[%s242 + $0x30] sm:$0xff]
        %v278 = vld [vmem:[%s242 + $0x38] sm:$0xff]
        %v279 = vadd.f32 %v271, %v272
        %280 = vadd.xlane.f32.xlu0 %v279
        %v281 = vpop.xlane.xlu0 %280
        %v282 = vadd.f32 %v273, %v274
        %283 = vadd.xlane.f32.xlu0 %v282
        %v284 = vpop.xlane.xlu0 %283
        %v285 = vadd.f32 %v275, %v276
        %286 = vadd.xlane.f32.xlu0 %v285
        %v287 = vpop.xlane.xlu0 %286
        %v288 = vadd.f32 %v277, %v278
        %289 = vadd.xlane.f32.xlu0 %v288
        %v290 = vpop.xlane.xlu0 %289
        %v291 = vmul.f32 %v281, 0.00390625
        %v292 = vmul.f32 %v284, 0.00390625
        %v293 = vmul.f32 %v287, 0.00390625
        %v294 = vmul.f32 %v290, 0.00390625
        %v295 = vld [vmem:[%s1] sm:$0xff]
        %v296 = vld [vmem:[%s1 + $0x8] sm:$0xff]
        %v297 = vld [vmem:[%s1 + $0x10] sm:$0xff]
        %v298 = vld [vmem:[%s1 + $0x18] sm:$0xff]
        %v299 = vld [vmem:[%s2] sm:$0x1]
        %v304 = vlaneseq
        %v305 = vand.u32 %v304, 127
        %v306 = vlaneseq
        %v307 = vshrl.u32 %v306, 7
        %v308 = vsub.s32 %v305, %v307
        %v309 = vrot.slane %v291, %v308
        %v310 = vadd.s32 %v305, 4294967288
        %v311 = vlaneseq
        %v312 = vshrl.u32 %v311, 7
        %v313 = vsub.s32 %v310, %v312
        %v314 = vrot.slane %v292, %v313
        %vm315 = vcmask 130112
        %v316 = vsel %vm315, %v314, %v309
        %v317 = vadd.s32 %v305, 4294967280
        %v318 = vlaneseq
        %v319 = vshrl.u32 %v318, 7
        %v320 = vsub.s32 %v317, %v319
        %v321 = vrot.slane %v293, %v320
        %vm322 = vcmask 195712
        %v323 = vsel %vm322, %v321, %v316
        %v324 = vadd.s32 %v305, 4294967272
        %v325 = vlaneseq
        %v326 = vshrl.u32 %v325, 7
        %v327 = vsub.s32 %v324, %v326
        %v328 = vrot.slane %v294, %v327
        %vm329 = vcmask 261312
        %v330 = vsel %vm329, %v328, %v323
        %vm331 = vcmask 261120
        %v332 = vsel %vm331, %v330, 0
        %334 = vmatprep.subr.mxu0 0.0
        %335 = vmatpush1.msra.mxu0 %v295
        %336 = vmatprep.subr.mxu0 0.0
        %337 = vmatpush1.msra.mxu0 %v296
        %338 = vmatprep.subr.mxu0 0.0
        %339 = vmatpush1.msra.mxu0 %v297
        %340 = vmatprep.subr.mxu0 0.0
        %341 = vmatpush1.msra.mxu0 %v298
        %342 = vmatprep.subr.mxu0 0.0
        %343 = vmatpush1.msra.mxu0 0.0
        %344 = vmatprep.subr.mxu0 0.0
        %345 = vmatpush1.msra.mxu0 0.0
        %346 = vmatprep.subr.mxu0 0.0
        %347 = vmatpush1.msra.mxu0 0.0
        %348 = vmatprep.subr.mxu0 0.0
        %349 = vmatpush1.msra.mxu0 0.0
        %350 = vmatprep.subr.mxu0 0.0
        %351 = vmatpush1.msra.mxu0 0.0
        %352 = vmatprep.subr.mxu0 0.0
        %353 = vmatpush1.msra.mxu0 0.0
        %354 = vmatprep.subr.mxu0 0.0
        %355 = vmatpush1.msra.mxu0 0.0
        %356 = vmatprep.subr.mxu0 0.0
        %357 = vmatpush1.msra.mxu0 0.0
        %358 = vmatprep.subr.mxu0 0.0
        %359 = vmatpush1.msra.mxu0 0.0
        %360 = vmatprep.subr.mxu0 0.0
        %361 = vmatpush1.msra.mxu0 0.0
        %362 = vmatprep.subr.mxu0 0.0
        %363 = vmatpush1.msra.mxu0 0.0
        %364 = vmatprep.subr.mxu0 0.0
        %365 = vmatpush1.msra.mxu0 0.0
        %366 = vmatprep.subr.mxu0 0.0
        %367 = vmatpush1.msra.mxu0 0.0
        %368 = vmatprep.subr.mxu0 0.0
        %369 = vmatpush1.msra.mxu0 0.0
        %370 = vmatprep.subr.mxu0 0.0
        %371 = vmatpush1.msra.mxu0 0.0
        %372 = vmatprep.subr.mxu0 0.0
        %373 = vmatpush1.msra.mxu0 0.0
        %374 = vmatprep.subr.mxu0 0.0
        %375 = vmatpush1.msra.mxu0 0.0
        %376 = vmatprep.subr.mxu0 0.0
        %377 = vmatpush1.msra.mxu0 0.0
        %378 = vmatprep.subr.mxu0 0.0
        %379 = vmatpush1.msra.mxu0 0.0
        %380 = vmatprep.subr.mxu0 0.0
        %381 = vmatpush1.msra.mxu0 0.0
        %382 = vmatprep.subr.mxu0 0.0
        %383 = vmatpush1.msra.mxu0 0.0
        %384 = vmatprep.subr.mxu0 0.0
        %385 = vmatpush1.msra.mxu0 0.0
        %386 = vmatprep.subr.mxu0 0.0
        %387 = vmatpush1.msra.mxu0 0.0
        %388 = vmatprep.subr.mxu0 0.0
        %389 = vmatpush1.msra.mxu0 0.0
        %390 = vmatprep.subr.mxu0 0.0
        %391 = vmatpush1.msra.mxu0 0.0
        %392 = vmatprep.subr.mxu0 0.0
        %393 = vmatpush1.msra.mxu0 0.0
        %394 = vmatprep.subr.mxu0 0.0
        %395 = vmatpush1.msra.mxu0 0.0
        %396 = vmatprep.subr.mxu0 0.0
        %397 = vmatpush1.msra.mxu0 0.0
        %398 = vmatprep.mubr.f32.mxu0 0.0
        %399 = vmatmul.mubr.f32.gmra.mrb[0].mxu0 %v332
        %v400 = vpop.f32.mrb[0].mxu0
        %v401 = vadd.f32 %v299, %v400
        %v402 = vpop.f32.mrb[0].mxu0
        %403 = vdwg.mxu0
        %s404 = sld [smem:[#allocation2]]
        %vm405 = vcmp.ge.f32.partialorder %v401, 0.0
        %v406 = vstv %s404
        %v407 = vmul.f32 %v406, %v401
        %v408 = vsel %vm405, %v401, %v407
        %v409 = vld [vmem:[%s3] sm:$0x3]
        %v410 = vld [vmem:[%s4] sm:$0x1]
        %vm411 = vcmask 15360
        %v413 = vsel %vm411, %v408, 0
        %vm415 = vcmask 1041408
        %v417 = vsel %vm415, %v409, 0
        %419 = vmatprep.subr.mxu0 0.0
        %420 = vmatpush1.msra.mxu0 %v417
        %421 = vmatprep.subr.mxu0 0.0
        %422 = vmatpush1.msra.mxu0 0.0
        %423 = vmatprep.subr.mxu0 0.0
        %424 = vmatpush1.msra.mxu0 0.0
        %425 = vmatprep.subr.mxu0 0.0
        %426 = vmatpush1.msra.mxu0 0.0
        %427 = vmatprep.subr.mxu0 0.0
        %428 = vmatpush1.msra.mxu0 0.0
        %429 = vmatprep.subr.mxu0 0.0
        %430 = vmatpush1.msra.mxu0 0.0
        %431 = vmatprep.subr.mxu0 0.0
        %432 = vmatpush1.msra.mxu0 0.0
        %433 = vmatprep.subr.mxu0 0.0
        %434 = vmatpush1.msra.mxu0 0.0
        %435 = vmatprep.subr.mxu0 0.0
        %436 = vmatpush1.msra.mxu0 0.0
        %437 = vmatprep.subr.mxu0 0.0
        %438 = vmatpush1.msra.mxu0 0.0
        %439 = vmatprep.subr.mxu0 0.0
        %440 = vmatpush1.msra.mxu0 0.0
        %441 = vmatprep.subr.mxu0 0.0
        %442 = vmatpush1.msra.mxu0 0.0
        %443 = vmatprep.subr.mxu0 0.0
        %444 = vmatpush1.msra.mxu0 0.0
        %445 = vmatprep.subr.mxu0 0.0
        %446 = vmatpush1.msra.mxu0 0.0
        %447 = vmatprep.subr.mxu0 0.0
        %448 = vmatpush1.msra.mxu0 0.0
        %449 = vmatprep.subr.mxu0 0.0
        %450 = vmatpush1.msra.mxu0 0.0
        %451 = vmatprep.subr.mxu0 0.0
        %452 = vmatpush1.msra.mxu0 0.0
        %453 = vmatprep.subr.mxu0 0.0
        %454 = vmatpush1.msra.mxu0 0.0
        %455 = vmatprep.subr.mxu0 0.0
        %456 = vmatpush1.msra.mxu0 0.0
        %457 = vmatprep.subr.mxu0 0.0
        %458 = vmatpush1.msra.mxu0 0.0
        %459 = vmatprep.subr.mxu0 0.0
        %460 = vmatpush1.msra.mxu0 0.0
        %461 = vmatprep.subr.mxu0 0.0
        %462 = vmatpush1.msra.mxu0 0.0
        %463 = vmatprep.subr.mxu0 0.0
        %464 = vmatpush1.msra.mxu0 0.0
        %465 = vmatprep.subr.mxu0 0.0
        %466 = vmatpush1.msra.mxu0 0.0
        %467 = vmatprep.subr.mxu0 0.0
        %468 = vmatpush1.msra.mxu0 0.0
        %469 = vmatprep.subr.mxu0 0.0
        %470 = vmatpush1.msra.mxu0 0.0
        %471 = vmatprep.subr.mxu0 0.0
        %472 = vmatpush1.msra.mxu0 0.0
        %473 = vmatprep.subr.mxu0 0.0
        %474 = vmatpush1.msra.mxu0 0.0
        %475 = vmatprep.subr.mxu0 0.0
        %476 = vmatpush1.msra.mxu0 0.0
        %477 = vmatprep.subr.mxu0 0.0
        %478 = vmatpush1.msra.mxu0 0.0
        %479 = vmatprep.subr.mxu0 0.0
        %480 = vmatpush1.msra.mxu0 0.0
        %481 = vmatprep.subr.mxu0 0.0
        %482 = vmatpush1.msra.mxu0 0.0
        %483 = vmatprep.mubr.f32.mxu0 0.0
        %484 = vmatmul.mubr.f32.gmra.mrb[0].mxu0 %v413
        %v485 = vpop.f32.mrb[0].mxu0
        %v486 = vadd.f32 %v410, %v485
        %v487 = vpop.f32.mrb[0].mxu0
        %488 = vdwg.mxu0
        %v489 = vxor.u32 %v486, 2147483648
        %v490 = vmul.f32 %v489, 1.442695
        %v491 = vpow.pop %v490
        %v492 = vadd.f32 %v491, 1.0
        %v493 = vrcp.pop %v492
        %v494 = vmul.f32 1.0, %v493
        %v495 = vlaneseq
        %v496 = vshrl.u32 %v495, 7
        %v497 = vsub.s32 0, %v496
        %v498 = vrot.slane %v494, %v497
        %500 = vbcast.lane.b32.xlu0 %v498, 256
        %v501 = vpop.permute.xlu0 %500
        %s503 = sor.u32 256, 8
        %504 = vbcast.lane.b32.xlu0 %v498, %s503
        %v505 = vpop.permute.xlu0 %504
        %s507 = sor.u32 256, 16
        %508 = vbcast.lane.b32.xlu0 %v498, %s507
        %v509 = vpop.permute.xlu0 %508
        %s511 = sor.u32 256, 24
        %512 = vbcast.lane.b32.xlu0 %v498, %s511
        %v513 = vpop.permute.xlu0 %512
        %v514 = vmul.f32 %v271, %v501
        %v515 = vmul.f32 %v272, %v501
        %v516 = vmul.f32 %v273, %v505
        %v517 = vmul.f32 %v274, %v505
        %v518 = vmul.f32 %v275, %v509
        %v519 = vmul.f32 %v276, %v509
        %v520 = vmul.f32 %v277, %v513
        %v521 = vmul.f32 %v278, %v513
        %522 = vst [vmem:[%s270] sm:$0xff] %v514
        %523 = vst [vmem:[%s270 + $0x8] sm:$0xff] %v515
        %524 = vst [vmem:[%s270 + $0x10] sm:$0xff] %v516
        %525 = vst [vmem:[%s270 + $0x18] sm:$0xff] %v517
        %526 = vst [vmem:[%s270 + $0x20] sm:$0xff] %v518
        %527 = vst [vmem:[%s270 + $0x28] sm:$0xff] %v519
        %528 = vst [vmem:[%s270 + $0x30] sm:$0xff] %v520
        %529 = vst [vmem:[%s270 + $0x38] sm:$0xff] %v521
        %s530 = sand.u32 %s163, 1
        %s531 = scalar_lea.sflag [#allocation5], %s530
        %s532 = sand.u32 %s163, 1
        %s533 = smul.addr %s532, 64
        %s534 = scalar_lea.vmem [#allocation6], %s533
        // Predicated region
        $region49: #{tpu_custom_call.1} parent=43 // pred_check
          %p535 = pneg %p173
        $region50: #{tpu_custom_call.1} parent=43 // pred_check_branch
          %537 = sbr.rel (%p535) target = $region52
        $region51: #{tpu_custom_call.1} parent=43 // pred_region
          %s539 = ssub.s32 1024, 1024
          %540 = vsyncadd %s531, %s539
          %s541 = smul.addr %s24, 8
          %s542 = smul.addr %s541, 128
          %s543 = scalar_lea.hbm %s6, %s542
          %s544 = sshll.u32 %s534, 4
          %s545 = int_to_ptr.vmem [resolvable:$true] %s544
          %550 = dma.vmem_to_hbm [thread:$0]  %s545, 1024, %s543, %s531, 256, 256, 16
        $region52: #{tpu_custom_call.1} parent=43 // pred_fallthru
          _
      $region44: #{tpu_custom_call.1} parent=5 // pred_fallthru
        _
      %p551 = scmp.le.s32.totalorder 2, %s19
      // Predicated region
      $region53: #{tpu_custom_call.1} parent=5 // pred_check
        %p552 = pneg %p551
      $region54: #{tpu_custom_call.1} parent=5 // pred_check_branch
        %554 = sbr.rel (%p552) target = $region56
      $region55: #{tpu_custom_call.1} parent=5 // pred_region
        %s555 = ssub.s32 %s19, 2
        // Predicated region
        $region57: #{tpu_custom_call.1} parent=55 // pred_check
          %p556 = pneg %p179
        $region58: #{tpu_custom_call.1} parent=55 // pred_check_branch
          %558 = sbr.rel (%p556) target = $region60
        $region59: #{tpu_custom_call.1} parent=55 // pred_region
          %s559 = sand.u32 %s164, 1
          %s560 = scalar_lea.sflag [#allocation5], %s559
          %s561 = sand.u32 %s164, 1
          %s562 = smul.addr %s561, 64
          %s563 = scalar_lea.vmem [#allocation6], %s562
          %564 = dma.done %s560, 1024
        $region60: #{tpu_custom_call.1} parent=55 // pred_fallthru
          _
      $region56: #{tpu_custom_call.1} parent=5 // pred_fallthru
        _
    $region6: #{tpu_custom_call.1} parent=1 // loop_footer
      %s23 = sadd.s32 1, %s19
    $region7: #{tpu_custom_call.1} parent=1 // loop_footer_branch
      %18 = sbr.rel target = $region3
    $region8: #{tpu_custom_call.1} parent=1 // loop_exit
      _
    %565 = vsyncpa [#allocation4], 1
    %s566 = scalar_lea.sflag [#allocation4], 1
    %567 = vsyncpa %s566, 1
    %568 = vsyncpa [#allocation5], 1
    %s569 = scalar_lea.sflag [#allocation5], 1
    %570 = vsyncpa %s569, 1

</llo_original>
